<compile_context>
chip_gen: v5e
topology: v5e:2x2
jax: 0.10.0
libtpu: 0.0.40
codegen_flags: <defaults>
</compile_context>

<pallas_src>
import functools

import jax
import jax.numpy as jnp
from jax.experimental import pallas as pl
from jax.experimental.pallas import tpu as pltpu


def _gate_net_kernel(x_ref, w1_ref, b1_ref, w2_ref, b2_ref, out_ref):
    # x streamed in its native dtype; cast to the matmul dtype in-register
    # (cheaper than an extra wrapper-side cast pass through HBM).
    x = x_ref[...].astype(w1_ref.dtype)

    # hidden = relu(x @ W1 + b1): MXU matmul with f32 accumulation,
    # bias add + ReLU in f32 on the VPU.
    h = jnp.dot(x, w1_ref[...], preferred_element_type=jnp.float32) + b1_ref[...]
    h = jnp.maximum(h, 0.0)

    # TODO(synk): nn.Dropout with p > 0 (training mode) would need
    # pltpu.prng_seed / pltpu.prng_random_bits; module default p = 0.0 is an
    # identity, so nothing is emitted here.

    h = h.astype(w2_ref.dtype)
    out = jnp.dot(h, w2_ref[...], preferred_element_type=jnp.float32) + b2_ref[...]
    out_ref[...] = out.astype(out_ref.dtype)   # bf16 store: half the output bytes


def _round_up(n, m):
    return ((n + m - 1) // m) * m


def prepare_params(params, compute_dtype=jnp.bfloat16):
    """One-time lane-dense padding (multiples of 128) + cast of the weights.

    Call once per parameter set, outside the per-call path, so the forward
    never repacks the weight matrices through HBM on every invocation.
    Zero-padded columns/rows are a mathematical no-op through ReLU and the
    second matmul.  Returns (padded_params, d_output).
    """
    w1, b1, w2, b2 = params
    d_model, d_hidden = w1.shape
    d_output = w2.shape[1]
    d_hidden_p = _round_up(d_hidden, 128)
    d_output_p = _round_up(d_output, 128)

    w1p = jnp.zeros((d_model, d_hidden_p), compute_dtype).at[:, :d_hidden].set(
        w1.astype(compute_dtype))
    w2p = jnp.zeros((d_hidden_p, d_output_p), compute_dtype).at[:d_hidden, :d_output].set(
        w2.astype(compute_dtype))
    b1p = jnp.zeros((1, d_hidden_p), jnp.float32).at[:, :d_hidden].set(
        b1.reshape(1, -1).astype(jnp.float32))
    b2p = jnp.zeros((1, d_output_p), jnp.float32).at[:, :d_output].set(
        b2.reshape(1, -1).astype(jnp.float32))
    return (w1p, b1p, w2p, b2p), d_output


@functools.partial(jax.jit, static_argnames=("d_output", "block_b"))
def gate_net_forward(x, padded_params, *, d_output, block_b=128):
    """x: (B, d_model).  padded_params: output of prepare_params()."""
    w1p, b1p, w2p, b2p = padded_params
    B, d_model = x.shape
    d_hidden_p = w1p.shape[1]
    d_output_p = w2p.shape[1]
    assert w1p.shape[0] == d_model
    assert block_b % 8 == 0, "block_b must be a multiple of the sublane tile"

    # Batch padding only when the tile does not divide B (no-op in the common case).
    b_p = _round_up(B, block_b)
    if b_p != B:
        x = jnp.zeros((b_p, d_model), x.dtype).at[:B].set(x)

    grid = (b_p // block_b,)
    out_dtype = w1p.dtype   # bf16 output; accumulation stays f32 inside the kernel

    cost = pl.CostEstimate(
        flops=2 * b_p * (d_model * d_hidden_p + d_hidden_p * d_output_p),
        transcendentals=0,
        bytes_accessed=(x.size * x.dtype.itemsize
                        + (w1p.size + w2p.size) * w1p.dtype.itemsize
                        + (b1p.size + b2p.size) * 4
                        + b_p * d_output_p * jnp.dtype(out_dtype).itemsize),
    )

    out = pl.pallas_call(
        _gate_net_kernel,
        out_shape=jax.ShapeDtypeStruct((b_p, d_output_p), out_dtype),
        grid_spec=pltpu.PrefetchScalarGridSpec(
            num_scalar_prefetch=0,
            grid=grid,
            in_specs=[
                # x tile (streamed); K dim = full array extent, MXU pads K internally.
                pl.BlockSpec((block_b, d_model), lambda i: (i, 0)),
                pl.BlockSpec((d_model, d_hidden_p), lambda i: (0, 0)),    # W1 (resident)
                pl.BlockSpec((1, d_hidden_p), lambda i: (0, 0)),          # b1
                pl.BlockSpec((d_hidden_p, d_output_p), lambda i: (0, 0)), # W2 (resident)
                pl.BlockSpec((1, d_output_p), lambda i: (0, 0)),          # b2
            ],
            out_specs=pl.BlockSpec((block_b, d_output_p), lambda i: (i, 0)),
        ),
        compiler_params=pltpu.CompilerParams(
            dimension_semantics=("parallel",),   # batch axis -> both TCs on v7x
        ),
        cost_estimate=cost,
    )(x, w1p, b1p, w2p, b2p)

    # Slice only when padding was actually applied (avoids an extra HBM pass
    # whenever the consumer can take the lane-dense padded buffer directly).
    if b_p != B or d_output_p != d_output:
        out = out[:B, :d_output]
    return out


def init_params(key, d_model, d_hidden, d_output):
    """Deterministic synthetic init matching nn.Linear's uniform(-1/sqrt(fan_in), ...)."""
    ks = jax.random.split(key, 4)

    def lin(kw, kb, fan_in, fan_out):
        scale = 1.0 / jnp.sqrt(jnp.float32(fan_in))
        w = jax.random.uniform(kw, (fan_in, fan_out), jnp.float32, -scale, scale)
        b = jax.random.uniform(kb, (1, fan_out), jnp.float32, -scale, scale)
        return w, b

    w1, b1 = lin(ks[0], ks[1], d_model, d_hidden)
    w2, b2 = lin(ks[2], ks[3], d_hidden, d_output)
    return (w1, b1, w2, b2)


def reference_forward(x, params, compute_dtype=jnp.bfloat16):
    """Pure-JAX reference with the same bf16-matmul / f32-accumulate recipe."""
    w1, b1, w2, b2 = params
    xc = x.astype(compute_dtype)
    h = jnp.dot(xc, w1.astype(compute_dtype),
                preferred_element_type=jnp.float32) + b1.reshape(1, -1)
    h = jnp.maximum(h, 0.0)
    out = jnp.dot(h.astype(compute_dtype), w2.astype(compute_dtype),
                  preferred_element_type=jnp.float32) + b2.reshape(1, -1)
    return out


if __name__ == "__main__":
    # Small shapes consistent with the module; grid = (8,) with block_b = 128
    # so each v7x TensorCore gets >= 4 pipeline steps.
    B, d_model, d_hidden, d_output = 1024, 64, 128, 64

    key = jax.random.PRNGKey(0)
    k_x, k_p = jax.random.split(key)
    x = jax.random.normal(k_x, (B, d_model), jnp.float32)
    params = init_params(k_p, d_model, d_hidden, d_output)

    # One-time weight repack (outside the per-call path).
    padded_params, d_out = prepare_params(params)

    out = gate_net_forward(x, padded_params, d_output=d_out)
    out = jax.block_until_ready(out)

    ref = reference_forward(x, params)
    assert out.shape == ref.shape, (out.shape, ref.shape)
    out_f32 = out.astype(jnp.float32)
    err = float(jnp.max(jnp.abs(out_f32 - ref)))
    # Output is stored in bf16 (accumulation f32), so tolerance covers the
    # final bf16 rounding of the store.
    assert jnp.allclose(out_f32, ref, atol=3e-2, rtol=3e-2), f"max |err| = {err}"

    print("KERNEL_OK")
</pallas_src>

<mosaic_0001>
module attributes {stable_mosaic.version = 11 : i64} {
  func.func @_gate_net_kernel(%arg0: i32, %arg1: memref<128x64xf32, #tpu.memory_space<vmem>>, %arg2: memref<64x128xbf16, #tpu.memory_space<vmem>>, %arg3: memref<1x128xf32, #tpu.memory_space<vmem>>, %arg4: memref<128x128xbf16, #tpu.memory_space<vmem>>, %arg5: memref<1x128xf32, #tpu.memory_space<vmem>>, %arg6: memref<128x128xbf16, #tpu.memory_space<vmem>>) attributes {dimension_semantics = [#tpu.dimension_semantics<parallel>], iteration_bounds = array<i64: 8>, scalar_prefetch = 0 : i64, scratch_operands = 0 : i64, tpu.core_type = #tpu.core_type<tc>, window_params = [{transform_indices = @transform_0, window_bounds = array<i64: 128, 64>}, {pipeline_mode = #tpu.pipeline_mode<synchronous>, transform_indices = @transform_1, window_bounds = array<i64: 64, 128>}, {pipeline_mode = #tpu.pipeline_mode<synchronous>, transform_indices = @transform_2, window_bounds = array<i64: 1, 128>}, {pipeline_mode = #tpu.pipeline_mode<synchronous>, transform_indices = @transform_3, window_bounds = array<i64: 128, 128>}, {pipeline_mode = #tpu.pipeline_mode<synchronous>, transform_indices = @transform_4, window_bounds = array<i64: 1, 128>}, {transform_indices = @transform_5, window_bounds = array<i64: 128, 128>}]} {
    %c0 = arith.constant 0 : index
    %c0_0 = arith.constant 0 : index
    %0 = vector.load %arg1[%c0, %c0_0] : memref<128x64xf32, #tpu.memory_space<vmem>>, vector<128x64xf32>
    %1 = arith.truncf %0 : vector<128x64xf32> to vector<128x64xbf16>
    %c0_1 = arith.constant 0 : index
    %c0_2 = arith.constant 0 : index
    %2 = vector.load %arg2[%c0_1, %c0_2] : memref<64x128xbf16, #tpu.memory_space<vmem>>, vector<64x128xbf16>
    %cst = arith.constant dense<0.000000e+00> : vector<128x128xf32>
    %3 = tpu.matmul %1, %2, %cst {dimension_numbers = #tpu.dot_dimension_numbers<[1], [0], [0], [1], [0, 0, 1, 1], [], []>} : vector<128x64xbf16>, vector<64x128xbf16>, vector<128x128xf32> -> vector<128x128xf32>
    %c0_3 = arith.constant 0 : index
    %c0_4 = arith.constant 0 : index
    %4 = vector.load %arg3[%c0_3, %c0_4] : memref<1x128xf32, #tpu.memory_space<vmem>>, vector<1x128xf32>
    %5 = vector.broadcast %4 : vector<1x128xf32> to vector<128x128xf32>
    %6 = arith.addf %3, %5 : vector<128x128xf32>
    %cst_5 = arith.constant 0.000000e+00 : f32
    %7 = vector.broadcast %cst_5 : f32 to vector<128x128xf32>
    %8 = arith.maximumf %6, %7 : vector<128x128xf32>
    %9 = arith.truncf %8 : vector<128x128xf32> to vector<128x128xbf16>
    %c0_6 = arith.constant 0 : index
    %c0_7 = arith.constant 0 : index
    %10 = vector.load %arg4[%c0_6, %c0_7] : memref<128x128xbf16, #tpu.memory_space<vmem>>, vector<128x128xbf16>
    %cst_8 = arith.constant dense<0.000000e+00> : vector<128x128xf32>
    %11 = tpu.matmul %9, %10, %cst_8 {dimension_numbers = #tpu.dot_dimension_numbers<[1], [0], [0], [1], [0, 0, 1, 1], [], []>} : vector<128x128xbf16>, vector<128x128xbf16>, vector<128x128xf32> -> vector<128x128xf32>
    %c0_9 = arith.constant 0 : index
    %c0_10 = arith.constant 0 : index
    %12 = vector.load %arg5[%c0_9, %c0_10] : memref<1x128xf32, #tpu.memory_space<vmem>>, vector<1x128xf32>
    %13 = vector.broadcast %12 : vector<1x128xf32> to vector<128x128xf32>
    %14 = arith.addf %11, %13 : vector<128x128xf32>
    %15 = arith.truncf %14 : vector<128x128xf32> to vector<128x128xbf16>
    %c0_11 = arith.constant 0 : index
    %c0_12 = arith.constant 0 : index
    %16 = vector.load %arg6[%c0_11, %c0_12] : memref<128x128xbf16, #tpu.memory_space<vmem>>, vector<128x128xbf16>
    tpu.vector_store %arg6[%c0_11, %c0_12], %15 {strides = array<i32>} : memref<128x128xbf16, #tpu.memory_space<vmem>>, vector<128x128xbf16>,
    return
  }
  func.func @transform_0(%arg0: i32) -> (i32, i32) {
    %c0_i32 = arith.constant 0 : i32
    %c0_i32_0 = arith.constant 0 : i32
    return %arg0, %c0_i32 : i32, i32
  }
  func.func @transform_1(%arg0: i32) -> (i32, i32) {
    %c0_i32 = arith.constant 0 : i32
    %c0_i32_0 = arith.constant 0 : i32
    %c0_i32_1 = arith.constant 0 : i32
    return %c0_i32, %c0_i32_0 : i32, i32
  }
  func.func @transform_2(%arg0: i32) -> (i32, i32) {
    %c0_i32 = arith.constant 0 : i32
    %c0_i32_0 = arith.constant 0 : i32
    %c0_i32_1 = arith.constant 0 : i32
    return %c0_i32, %c0_i32_0 : i32, i32
  }
  func.func @transform_3(%arg0: i32) -> (i32, i32) {
    %c0_i32 = arith.constant 0 : i32
    %c0_i32_0 = arith.constant 0 : i32
    %c0_i32_1 = arith.constant 0 : i32
    return %c0_i32, %c0_i32_0 : i32, i32
  }
  func.func @transform_4(%arg0: i32) -> (i32, i32) {
    %c0_i32 = arith.constant 0 : i32
    %c0_i32_0 = arith.constant 0 : i32
    %c0_i32_1 = arith.constant 0 : i32
    return %c0_i32, %c0_i32_0 : i32, i32
  }
  func.func @transform_5(%arg0: i32) -> (i32, i32) {
    %c0_i32 = arith.constant 0 : i32
    %c0_i32_0 = arith.constant 0 : i32
    return %arg0, %c0_i32 : i32, i32
  }
}

</mosaic_0001>

<llo_original>
// kernel: gate_net_forward.1
$region0: #{gate_net_forward.1}
  #allocation0 [shape = 'u32[]', space=smem, size = 0x4, offset = 0x4, fixed_abs, tag = 'smem constant byte address 0x4 - core index']
  #allocation1 [shape = 'u32[72,128]{1,0:T(1,128)}', space=vmem, size = 0x9000, scoped, tag = 'internal scratch']
  %s0 = inlined_call_operand.vmem [shape: f32[1024,64], index: 0, kind: input, shape index: {}]
  %s1 = inlined_call_operand.vmem [shape: bf16[64,128], index: 1, kind: input, shape index: {}]
  %s2 = inlined_call_operand.vmem [shape: f32[1,128], index: 2, kind: input, shape index: {}]
  %s3 = inlined_call_operand.vmem [shape: bf16[128,128], index: 3, kind: input, shape index: {}]
  %s4 = inlined_call_operand.vmem [shape: f32[1,128], index: 4, kind: input, shape index: {}]
  %s5 = inlined_call_operand.vmem [shape: bf16[1024,128], index: 5, kind: output, shape index: {}]
  %s6 = sld [smem:[#allocation0]]
  $region53: #{gate_net_forward.1} parent=0
    _
  %s8 = ssub.s32 1, %s6
  %s9 = scalar_select 0, %s8, %s6
  loop: start=0, step=1, limit=10
  $region2: #{gate_net_forward.1} parent=0 // loop_pre_header
    _
  $region3: #{gate_net_forward.1} parent=0 // loop_header
    %s11 = sphi 0, %s15
    %p12 = scmp.ge.s32.totalorder %s11, 10
    %s21 = sphi 0, %s23
    %s24 = sphi 0, %s21
    %s25 = sphi 0, %s24
    %s41 = sphi 0, %s25
    %s45 = sphi 0, %s45
    %s47 = sphi 0, %s45
    %s48 = sphi 0, %s47
    %s62 = sphi 0, %s48
    %s66 = sphi 0, %s66
    %s68 = sphi 0, %s66
    %s69 = sphi 0, %s68
    %s83 = sphi 0, %s69
    %s87 = sphi 0, %s87
    %s89 = sphi 0, %s87
    %s90 = sphi 0, %s89
    %s104 = sphi 0, %s90
    %s108 = sphi 0, %s108
    %s110 = sphi 0, %s108
    %s111 = sphi 0, %s110
    %s125 = sphi 0, %s111
    %s131 = sphi 0, %s133
    %s134 = sphi 0, %s131
    %s135 = sphi 0, %s134
    %s151 = sphi 0, %s135
  $region4: #{gate_net_forward.1} parent=0 // loop_header_branch
    %14 = sbr.rel (%p12) target = $region8
  $region5: #{gate_net_forward.1} parent=0 // loop_body
    %s16 = ssub.s32 %s11, 1
    %s17 = ssub.s32 %s11, 2
    %s18 = sadd.s32 %s11, 1
    %s19 = ssub.s32 %s11, %s18
    %p20 = scmp.eq.s32.totalorder %s19, 0
    %s22 = sadd.s32 %s21, 1
    %s23 = scalar_select %p20, %s21, %s22
    %p26 = pneg %p20
    %p27 = scmp.eq.s32.totalorder %s11, 7
    %p28 = por %p26, %p27
    %p29 = scmp.ne.s32.totalorder %s21, %s24
    %p30 = scmp.eq.s32.totalorder %s11, 0
    %p31 = por %p29, %p30
    %p32 = scmp.ne.s32.totalorder %s21, %s24
    %p33 = scmp.eq.s32.totalorder %s16, 7
    %p34 = por %p32, %p33
    %p35 = scmp.ne.s32.totalorder %s24, %s25
    %p36 = scmp.eq.s32.totalorder %s16, 0
    %p37 = por %p35, %p36
    %p38 = scmp.ne.s32.totalorder %s24, %s25
    %p39 = scmp.eq.s32.totalorder %s17, 7
    %p40 = por %p38, %p39
    %p42 = scmp.ne.s32.totalorder %s25, %s41
    %p43 = scmp.eq.s32.totalorder %s17, 0
    %p44 = por %p42, %p43
    %s46 = sadd.s32 %s45, 1
    %p49 = scmp.eq.s32.totalorder %s11, 7
    %p50 = scmp.ne.s32.totalorder %s45, %s47
    %p51 = scmp.eq.s32.totalorder %s11, 0
    %p52 = por %p50, %p51
    %p53 = scmp.ne.s32.totalorder %s45, %s47
    %p54 = scmp.eq.s32.totalorder %s16, 7
    %p55 = por %p53, %p54
    %p56 = scmp.ne.s32.totalorder %s47, %s48
    %p57 = scmp.eq.s32.totalorder %s16, 0
    %p58 = por %p56, %p57
    %p59 = scmp.ne.s32.totalorder %s47, %s48
    %p60 = scmp.eq.s32.totalorder %s17, 7
    %p61 = por %p59, %p60
    %p63 = scmp.ne.s32.totalorder %s48, %s62
    %p64 = scmp.eq.s32.totalorder %s17, 0
    %p65 = por %p63, %p64
    %s67 = sadd.s32 %s66, 1
    %p70 = scmp.eq.s32.totalorder %s11, 7
    %p71 = scmp.ne.s32.totalorder %s66, %s68
    %p72 = scmp.eq.s32.totalorder %s11, 0
    %p73 = por %p71, %p72
    %p74 = scmp.ne.s32.totalorder %s66, %s68
    %p75 = scmp.eq.s32.totalorder %s16, 7
    %p76 = por %p74, %p75
    %p77 = scmp.ne.s32.totalorder %s68, %s69
    %p78 = scmp.eq.s32.totalorder %s16, 0
    %p79 = por %p77, %p78
    %p80 = scmp.ne.s32.totalorder %s68, %s69
    %p81 = scmp.eq.s32.totalorder %s17, 7
    %p82 = por %p80, %p81
    %p84 = scmp.ne.s32.totalorder %s69, %s83
    %p85 = scmp.eq.s32.totalorder %s17, 0
    %p86 = por %p84, %p85
    %s88 = sadd.s32 %s87, 1
    %p91 = scmp.eq.s32.totalorder %s11, 7
    %p92 = scmp.ne.s32.totalorder %s87, %s89
    %p93 = scmp.eq.s32.totalorder %s11, 0
    %p94 = por %p92, %p93
    %p95 = scmp.ne.s32.totalorder %s87, %s89
    %p96 = scmp.eq.s32.totalorder %s16, 7
    %p97 = por %p95, %p96
    %p98 = scmp.ne.s32.totalorder %s89, %s90
    %p99 = scmp.eq.s32.totalorder %s16, 0
    %p100 = por %p98, %p99
    %p101 = scmp.ne.s32.totalorder %s89, %s90
    %p102 = scmp.eq.s32.totalorder %s17, 7
    %p103 = por %p101, %p102
    %p105 = scmp.ne.s32.totalorder %s90, %s104
    %p106 = scmp.eq.s32.totalorder %s17, 0
    %p107 = por %p105, %p106
    %s109 = sadd.s32 %s108, 1
    %p112 = scmp.eq.s32.totalorder %s11, 7
    %p113 = scmp.ne.s32.totalorder %s108, %s110
    %p114 = scmp.eq.s32.totalorder %s11, 0
    %p115 = por %p113, %p114
    %p116 = scmp.ne.s32.totalorder %s108, %s110
    %p117 = scmp.eq.s32.totalorder %s16, 7
    %p118 = por %p116, %p117
    %p119 = scmp.ne.s32.totalorder %s110, %s111
    %p120 = scmp.eq.s32.totalorder %s16, 0
    %p121 = por %p119, %p120
    %p122 = scmp.ne.s32.totalorder %s110, %s111
    %p123 = scmp.eq.s32.totalorder %s17, 7
    %p124 = por %p122, %p123
    %p126 = scmp.ne.s32.totalorder %s111, %s125
    %p127 = scmp.eq.s32.totalorder %s17, 0
    %p128 = por %p126, %p127
    %s129 = ssub.s32 %s11, %s18
    %p130 = scmp.eq.s32.totalorder %s129, 0
    %s132 = sadd.s32 %s131, 1
    %s133 = scalar_select %p130, %s131, %s132
    %p136 = pneg %p130
    %p137 = scmp.eq.s32.totalorder %s11, 7
    %p138 = por %p136, %p137
    %p139 = scmp.ne.s32.totalorder %s131, %s134
    %p140 = scmp.eq.s32.totalorder %s11, 0
    %p141 = por %p139, %p140
    %p142 = scmp.ne.s32.totalorder %s131, %s134
    %p143 = scmp.eq.s32.totalorder %s16, 7
    %p144 = por %p142, %p143
    %p145 = scmp.ne.s32.totalorder %s134, %s135
    %p146 = scmp.eq.s32.totalorder %s16, 0
    %p147 = por %p145, %p146
    %p148 = scmp.ne.s32.totalorder %s134, %s135
    %p149 = scmp.eq.s32.totalorder %s17, 7
    %p150 = por %p148, %p149
    %p152 = scmp.ne.s32.totalorder %s135, %s151
    %p153 = scmp.eq.s32.totalorder %s17, 0
    %p154 = por %p152, %p153
    %p155 = scmp.le.s32.totalorder 1, %s11
    %p156 = scmp.lt.s32.totalorder %s11, 9
    %p157 = pnand %p155, %p156
    %p158 = pneg %p157
    // Predicated region
    $region9: #{gate_net_forward.1} parent=5 // pred_check
      _
    $region10: #{gate_net_forward.1} parent=5 // pred_check_branch
      %160 = sbr.rel (%p157) target = $region12
    $region11: #{gate_net_forward.1} parent=5 // pred_region
      %s161 = ssub.s32 %s11, 1
      // Predicated region
      $region13: #{gate_net_forward.1} parent=11 // pred_check
        %p162 = pneg %p58
      $region14: #{gate_net_forward.1} parent=11 // pred_check_branch
        %164 = sbr.rel (%p162) target = $region16
      $region15: #{gate_net_forward.1} parent=11 // pred_region
        _
      $region16: #{gate_net_forward.1} parent=11 // pred_fallthru
        _
      // Predicated region
      $region17: #{gate_net_forward.1} parent=11 // pred_check
        %p165 = pneg %p79
      $region18: #{gate_net_forward.1} parent=11 // pred_check_branch
        %167 = sbr.rel (%p165) target = $region20
      $region19: #{gate_net_forward.1} parent=11 // pred_region
        _
      $region20: #{gate_net_forward.1} parent=11 // pred_fallthru
        _
      // Predicated region
      $region21: #{gate_net_forward.1} parent=11 // pred_check
        %p168 = pneg %p100
      $region22: #{gate_net_forward.1} parent=11 // pred_check_branch
        %170 = sbr.rel (%p168) target = $region24
      $region23: #{gate_net_forward.1} parent=11 // pred_region
        _
      $region24: #{gate_net_forward.1} parent=11 // pred_fallthru
        _
      // Predicated region
      $region25: #{gate_net_forward.1} parent=11 // pred_check
        %p171 = pneg %p121
      $region26: #{gate_net_forward.1} parent=11 // pred_check_branch
        %173 = sbr.rel (%p171) target = $region28
      $region27: #{gate_net_forward.1} parent=11 // pred_region
        _
      $region28: #{gate_net_forward.1} parent=11 // pred_fallthru
        _
    $region12: #{gate_net_forward.1} parent=5 // pred_fallthru
      _
    %p174 = scmp.lt.s32.totalorder %s11, 8
    // Predicated region
    $region29: #{gate_net_forward.1} parent=5 // pred_check
      %p175 = pneg %p174
    $region30: #{gate_net_forward.1} parent=5 // pred_check_branch
      %177 = sbr.rel (%p175) target = $region32
    $region31: #{gate_net_forward.1} parent=5 // pred_region
      // Predicated region
      $region33: #{gate_net_forward.1} parent=31 // pred_check
        %p178 = pneg %p31
      $region34: #{gate_net_forward.1} parent=31 // pred_check_branch
        %180 = sbr.rel (%p178) target = $region36
      $region35: #{gate_net_forward.1} parent=31 // pred_region
        %s181 = smul.u32 16, %s11
        %p182 = scmp.lt.s32.totalorder %s181, 127
        %s183 = scalar_select %p182, %s181, 127
        %s184 = smul.addr %s183, 8
        %s185 = scalar_lea.vmem %s0, %s184
        %s186 = smul.u32 16, %s11
      $region36: #{gate_net_forward.1} parent=31 // pred_fallthru
        _
    $region32: #{gate_net_forward.1} parent=5 // pred_fallthru
      _
    %p187 = scmp.le.s32.totalorder 1, %s11
    %p188 = scmp.lt.s32.totalorder %s11, 9
    %p189 = pnand %p187, %p188
    %p190 = pneg %p189
    // Predicated region
    $region37: #{gate_net_forward.1} parent=5 // pred_check
      _
    $region38: #{gate_net_forward.1} parent=5 // pred_check_branch
      %192 = sbr.rel (%p189) target = $region40
    $region39: #{gate_net_forward.1} parent=5 // pred_region
      %s193 = ssub.s32 %s11, 1
      %s194 = smul.u32 16, %s16
      %p195 = scmp.lt.s32.totalorder %s194, 127
      %s196 = scalar_select %p195, %s194, 127
      %s197 = smul.addr %s196, 8
      %s198 = scalar_lea.vmem %s0, %s197
      %p199 = pneg %p37
      %p200 = pneg %p34
      %p201 = pneg %p58
      %p202 = pneg %p55
      %p203 = pneg %p79
      %p204 = pneg %p76
      %p205 = pneg %p100
      %p206 = pneg %p97
      %p207 = pneg %p121
      %p208 = pneg %p118
      %p209 = pneg %p147
      %p210 = pneg %p144
      %s211 = smul.u32 16, %s16
      %p212 = scmp.lt.s32.totalorder %s211, 127
      %s213 = scalar_select %p212, %s211, 127
      %s214 = smul.addr %s213, 4
      %s215 = scalar_lea.vmem %s5, %s214
      %s216 = smul.u32 16, %s16
      %p217 = scmp.lt.s32.totalorder %s216, 127
      %s218 = scalar_select %p217, %s216, 127
      %s219 = smul.addr %s218, 8
      %s220 = scalar_lea.vmem %s0, %s219
      %s221 = smul.u32 16, %s16
      %s222 = smul.u32 16, %s16
      %p223 = scmp.lt.s32.totalorder %s222, 127
      %s224 = scalar_select %p223, %s222, 127
      %s225 = smul.addr %s224, 4
      %s226 = scalar_lea.vmem %s5, %s225
      %s227 = smul.u32 16, %s16
      %v229 = vld [vmem:[%s220] sm:$0xff]
      %v230 = vld [vmem:[%s220 + $0x8] sm:$0xff]
      %v231 = vld [vmem:[%s220 + $0x10] sm:$0xff]
      %v232 = vld [vmem:[%s220 + $0x18] sm:$0xff]
      %v233 = vld [vmem:[%s220 + $0x20] sm:$0xff]
      %v234 = vld [vmem:[%s220 + $0x28] sm:$0xff]
      %v235 = vld [vmem:[%s220 + $0x30] sm:$0xff]
      %v236 = vld [vmem:[%s220 + $0x38] sm:$0xff]
      %v237 = vld [vmem:[%s220 + $0x40] sm:$0xff]
      %v238 = vld [vmem:[%s220 + $0x48] sm:$0xff]
      %v239 = vld [vmem:[%s220 + $0x50] sm:$0xff]
      %v240 = vld [vmem:[%s220 + $0x58] sm:$0xff]
      %v241 = vld [vmem:[%s220 + $0x60] sm:$0xff]
      %v242 = vld [vmem:[%s220 + $0x68] sm:$0xff]
      %v243 = vld [vmem:[%s220 + $0x70] sm:$0xff]
      %v244 = vld [vmem:[%s220 + $0x78] sm:$0xff]
      %v245 = vpack.c.bf16 %v230, %v229
      %v246 = vpack.c.bf16 %v232, %v231
      %v247 = vpack.c.bf16 %v234, %v233
      %v248 = vpack.c.bf16 %v236, %v235
      %v249 = vpack.c.bf16 %v238, %v237
      %v250 = vpack.c.bf16 %v240, %v239
      %v251 = vpack.c.bf16 %v242, %v241
      %v252 = vpack.c.bf16 %v244, %v243
      %v253 = vld [vmem:[%s1] sm:$0xf]
      %v254 = vld [vmem:[%s1 + $0x4] sm:$0xf]
      %v255 = vld [vmem:[%s1 + $0x8] sm:$0xf]
      %v256 = vld [vmem:[%s1 + $0xc] sm:$0xf]
      %v257 = vld [vmem:[%s1 + $0x10] sm:$0xf]
      %v258 = vld [vmem:[%s1 + $0x14] sm:$0xf]
      %v259 = vld [vmem:[%s1 + $0x18] sm:$0xf]
      %v260 = vld [vmem:[%s1 + $0x1c] sm:$0xf]
      %v261 = vld [vmem:[%s2] sm:$0x1]
      %v263 = vperm.slane %v261, 0
      %v273 = vunpack.c.l.b16 %v253
      %v274 = vunpack.c.l.b16 %v254
      %v275 = vunpack.c.l.b16 %v255
      %v276 = vunpack.c.l.b16 %v256
      %v277 = vunpack.c.l.b16 %v257
      %v278 = vunpack.c.l.b16 %v258
      %v279 = vunpack.c.l.b16 %v259
      %v280 = vunpack.c.l.b16 %v260
      %v281 = vpack.c.b16 %v274, %v273
      %v282 = vpack.c.b16 %v276, %v275
      %v283 = vpack.c.b16 %v278, %v277
      %v284 = vpack.c.b16 %v280, %v279
      %vm289 = vcmask 523264
      %v291 = vsel %vm289, %v245, 0
      %v294 = vsel %vm289, %v246, 0
      %v297 = vsel %vm289, %v247, 0
      %v300 = vsel %vm289, %v248, 0
      %v303 = vsel %vm289, %v249, 0
      %v306 = vsel %vm289, %v250, 0
      %v309 = vsel %vm289, %v251, 0
      %v312 = vsel %vm289, %v252, 0
      %314 = vmatpush.bf16.msra.mxu0 0
      %315 = vmatpush.bf16.msra.mxu0 0
      %316 = vmatpush.bf16.msra.mxu0 0
      %317 = vmatpush.bf16.msra.mxu0 0
      %318 = vmatpush.bf16.msra.mxu0 %v284
      %319 = vmatpush.bf16.msra.mxu0 %v283
      %320 = vmatpush.bf16.msra.mxu0 %v282
      %321 = vmatpush.bf16.msra.mxu0 %v281
      %322 = vmatmul.bf16.gmra.mxu0 %v291
      %v323 = vpop.f32.mrf.mxu0
      %v324 = vadd.f32 %v263, %v323
      %v325 = vpop.f32.mrf.mxu0
      %v326 = vadd.f32 %v263, %v325
      %327 = vmatmul.bf16.gmra.mxu0 %v294
      %v328 = vpop.f32.mrf.mxu0
      %v329 = vadd.f32 %v263, %v328
      %v330 = vpop.f32.mrf.mxu0
      %v331 = vadd.f32 %v263, %v330
      %332 = vmatmul.bf16.gmra.mxu0 %v297
      %v333 = vpop.f32.mrf.mxu0
      %v334 = vadd.f32 %v263, %v333
      %v335 = vpop.f32.mrf.mxu0
      %v336 = vadd.f32 %v263, %v335
      %337 = vmatmul.bf16.gmra.mxu0 %v300
      %v338 = vpop.f32.mrf.mxu0
      %v339 = vadd.f32 %v263, %v338
      %v340 = vpop.f32.mrf.mxu0
      %v341 = vadd.f32 %v263, %v340
      %342 = vmatmul.bf16.gmra.mxu0 %v303
      %v343 = vpop.f32.mrf.mxu0
      %v344 = vadd.f32 %v263, %v343
      %v345 = vpop.f32.mrf.mxu0
      %v346 = vadd.f32 %v263, %v345
      %347 = vmatmul.bf16.gmra.mxu0 %v306
      %v348 = vpop.f32.mrf.mxu0
      %v349 = vadd.f32 %v263, %v348
      %v350 = vpop.f32.mrf.mxu0
      %v351 = vadd.f32 %v263, %v350
      %352 = vmatmul.bf16.gmra.mxu0 %v309
      %v353 = vpop.f32.mrf.mxu0
      %v354 = vadd.f32 %v263, %v353
      %v355 = vpop.f32.mrf.mxu0
      %v356 = vadd.f32 %v263, %v355
      %357 = vmatmul.bf16.gmra.mxu0 %v312
      %v358 = vpop.f32.mrf.mxu0
      %v359 = vadd.f32 %v263, %v358
      %v360 = vpop.f32.mrf.mxu0
      %v361 = vadd.f32 %v263, %v360
      %362 = vdwg.mxu0
      %v363 = vmax.f32 %v324, 0.0
      %v364 = vmax.f32 %v326, 0.0
      %v365 = vmax.f32 %v329, 0.0
      %v366 = vmax.f32 %v331, 0.0
      %v367 = vmax.f32 %v334, 0.0
      %v368 = vmax.f32 %v336, 0.0
      %v369 = vmax.f32 %v339, 0.0
      %v370 = vmax.f32 %v341, 0.0
      %v371 = vmax.f32 %v344, 0.0
      %v372 = vmax.f32 %v346, 0.0
      %v373 = vmax.f32 %v349, 0.0
      %v374 = vmax.f32 %v351, 0.0
      %v375 = vmax.f32 %v354, 0.0
      %v376 = vmax.f32 %v356, 0.0
      %v377 = vmax.f32 %v359, 0.0
      %v378 = vmax.f32 %v361, 0.0
      %v379 = vpack.c.bf16 %v364, %v363
      %v380 = vpack.c.bf16 %v366, %v365
      %v381 = vpack.c.bf16 %v368, %v367
      %v382 = vpack.c.bf16 %v370, %v369
      %v383 = vpack.c.bf16 %v372, %v371
      %v384 = vpack.c.bf16 %v374, %v373
      %v385 = vpack.c.bf16 %v376, %v375
      %v386 = vpack.c.bf16 %v378, %v377
      %v387 = vld [vmem:[%s3] sm:$0xf]
      %v388 = vld [vmem:[%s3 + $0x4] sm:$0xf]
      %v389 = vld [vmem:[%s3 + $0x8] sm:$0xf]
      %v390 = vld [vmem:[%s3 + $0xc] sm:$0xf]
      %v391 = vld [vmem:[%s3 + $0x10] sm:$0xf]
      %v392 = vld [vmem:[%s3 + $0x14] sm:$0xf]
      %v393 = vld [vmem:[%s3 + $0x18] sm:$0xf]
      %v394 = vld [vmem:[%s3 + $0x1c] sm:$0xf]
      %v395 = vld [vmem:[%s3 + $0x20] sm:$0xf]
      %v396 = vld [vmem:[%s3 + $0x24] sm:$0xf]
      %v397 = vld [vmem:[%s3 + $0x28] sm:$0xf]
      %v398 = vld [vmem:[%s3 + $0x2c] sm:$0xf]
      %v399 = vld [vmem:[%s3 + $0x30] sm:$0xf]
      %v400 = vld [vmem:[%s3 + $0x34] sm:$0xf]
      %v401 = vld [vmem:[%s3 + $0x38] sm:$0xf]
      %v402 = vld [vmem:[%s3 + $0x3c] sm:$0xf]
      %v403 = vld [vmem:[%s4] sm:$0x1]
      %v405 = vperm.slane %v403, 0
      %v423 = vunpack.c.l.b16 %v387
      %v424 = vunpack.c.l.b16 %v388
      %v425 = vunpack.c.l.b16 %v389
      %v426 = vunpack.c.l.b16 %v390
      %v427 = vunpack.c.l.b16 %v391
      %v428 = vunpack.c.l.b16 %v392
      %v429 = vunpack.c.l.b16 %v393
      %v430 = vunpack.c.l.b16 %v394
      %v431 = vunpack.c.l.b16 %v395
      %v432 = vunpack.c.l.b16 %v396
      %v433 = vunpack.c.l.b16 %v397
      %v434 = vunpack.c.l.b16 %v398
      %v435 = vunpack.c.l.b16 %v399
      %v436 = vunpack.c.l.b16 %v400
      %v437 = vunpack.c.l.b16 %v401
      %v438 = vunpack.c.l.b16 %v402
      %v439 = vpack.c.b16 %v424, %v423
      %v440 = vpack.c.b16 %v426, %v425
      %v441 = vpack.c.b16 %v428, %v427
      %v442 = vpack.c.b16 %v430, %v429
      %v443 = vpack.c.b16 %v432, %v431
      %v444 = vpack.c.b16 %v434, %v433
      %v445 = vpack.c.b16 %v436, %v435
      %v446 = vpack.c.b16 %v438, %v437
      %455 = vmatpush.bf16.msra.mxu0 %v446
      %456 = vmatpush.bf16.msra.mxu0 %v445
      %457 = vmatpush.bf16.msra.mxu0 %v444
      %458 = vmatpush.bf16.msra.mxu0 %v443
      %459 = vmatpush.bf16.msra.mxu0 %v442
      %460 = vmatpush.bf16.msra.mxu0 %v441
      %461 = vmatpush.bf16.msra.mxu0 %v440
      %462 = vmatpush.bf16.msra.mxu0 %v439
      %463 = vmatmul.bf16.gmra.mxu0 %v379
      %v464 = vpop.f32.mrf.mxu0
      %v465 = vadd.f32 %v405, %v464
      %v466 = vpop.f32.mrf.mxu0
      %v467 = vadd.f32 %v405, %v466
      %468 = vmatmul.bf16.gmra.mxu0 %v380
      %v469 = vpop.f32.mrf.mxu0
      %v470 = vadd.f32 %v405, %v469
      %v471 = vpop.f32.mrf.mxu0
      %v472 = vadd.f32 %v405, %v471
      %473 = vmatmul.bf16.gmra.mxu0 %v381
      %v474 = vpop.f32.mrf.mxu0
      %v475 = vadd.f32 %v405, %v474
      %v476 = vpop.f32.mrf.mxu0
      %v477 = vadd.f32 %v405, %v476
      %478 = vmatmul.bf16.gmra.mxu0 %v382
      %v479 = vpop.f32.mrf.mxu0
      %v480 = vadd.f32 %v405, %v479
      %v481 = vpop.f32.mrf.mxu0
      %v482 = vadd.f32 %v405, %v481
      %483 = vmatmul.bf16.gmra.mxu0 %v383
      %v484 = vpop.f32.mrf.mxu0
      %v485 = vadd.f32 %v405, %v484
      %v486 = vpop.f32.mrf.mxu0
      %v487 = vadd.f32 %v405, %v486
      %488 = vmatmul.bf16.gmra.mxu0 %v384
      %v489 = vpop.f32.mrf.mxu0
      %v490 = vadd.f32 %v405, %v489
      %v491 = vpop.f32.mrf.mxu0
      %v492 = vadd.f32 %v405, %v491
      %493 = vmatmul.bf16.gmra.mxu0 %v385
      %v494 = vpop.f32.mrf.mxu0
      %v495 = vadd.f32 %v405, %v494
      %v496 = vpop.f32.mrf.mxu0
      %v497 = vadd.f32 %v405, %v496
      %498 = vmatmul.bf16.gmra.mxu0 %v386
      %v499 = vpop.f32.mrf.mxu0
      %v500 = vadd.f32 %v405, %v499
      %v501 = vpop.f32.mrf.mxu0
      %v502 = vadd.f32 %v405, %v501
      %503 = vdwg.mxu0
      %v504 = vpack.c.bf16 %v465, %v465
      %v505 = vpack.c.bf16 %v467, %v467
      %v506 = vpack.c.bf16 %v470, %v470
      %v507 = vpack.c.bf16 %v472, %v472
      %v508 = vpack.c.bf16 %v475, %v475
      %v509 = vpack.c.bf16 %v477, %v477
      %v510 = vpack.c.bf16 %v480, %v480
      %v511 = vpack.c.bf16 %v482, %v482
      %v512 = vpack.c.bf16 %v485, %v485
      %v513 = vpack.c.bf16 %v487, %v487
      %v514 = vpack.c.bf16 %v490, %v490
      %v515 = vpack.c.bf16 %v492, %v492
      %v516 = vpack.c.bf16 %v495, %v495
      %v517 = vpack.c.bf16 %v497, %v497
      %v518 = vpack.c.bf16 %v500, %v500
      %v519 = vpack.c.bf16 %v502, %v502
      %520 = vst [vmem:[%s226] sm:$0xf] %v504
      %521 = vst [vmem:[%s226 + $0x4] sm:$0xf] %v505
      %522 = vst [vmem:[%s226 + $0x8] sm:$0xf] %v506
      %523 = vst [vmem:[%s226 + $0xc] sm:$0xf] %v507
      %524 = vst [vmem:[%s226 + $0x10] sm:$0xf] %v508
      %525 = vst [vmem:[%s226 + $0x14] sm:$0xf] %v509
      %526 = vst [vmem:[%s226 + $0x18] sm:$0xf] %v510
      %527 = vst [vmem:[%s226 + $0x1c] sm:$0xf] %v511
      %528 = vst [vmem:[%s226 + $0x20] sm:$0xf] %v512
      %529 = vst [vmem:[%s226 + $0x24] sm:$0xf] %v513
      %530 = vst [vmem:[%s226 + $0x28] sm:$0xf] %v514
      %531 = vst [vmem:[%s226 + $0x2c] sm:$0xf] %v515
      %532 = vst [vmem:[%s226 + $0x30] sm:$0xf] %v516
      %533 = vst [vmem:[%s226 + $0x34] sm:$0xf] %v517
      %534 = vst [vmem:[%s226 + $0x38] sm:$0xf] %v518
      %535 = vst [vmem:[%s226 + $0x3c] sm:$0xf] %v519
      %s536 = smul.u32 16, %s16
      %p537 = scmp.lt.s32.totalorder %s536, 127
      %s538 = scalar_select %p537, %s536, 127
      %s539 = smul.addr %s538, 4
      %s540 = scalar_lea.vmem %s5, %s539
      // Predicated region
      $region41: #{gate_net_forward.1} parent=39 // pred_check
        %p541 = pneg %p144
      $region42: #{gate_net_forward.1} parent=39 // pred_check_branch
        %543 = sbr.rel (%p541) target = $region44
      $region43: #{gate_net_forward.1} parent=39 // pred_region
        %s544 = smul.u32 16, %s16
      $region44: #{gate_net_forward.1} parent=39 // pred_fallthru
        _
    $region40: #{gate_net_forward.1} parent=5 // pred_fallthru
      _
    %p545 = scmp.le.s32.totalorder 2, %s11
    // Predicated region
    $region45: #{gate_net_forward.1} parent=5 // pred_check
      %p546 = pneg %p545
    $region46: #{gate_net_forward.1} parent=5 // pred_check_branch
      %548 = sbr.rel (%p546) target = $region48
    $region47: #{gate_net_forward.1} parent=5 // pred_region
      %s549 = ssub.s32 %s11, 2
      // Predicated region
      $region49: #{gate_net_forward.1} parent=47 // pred_check
        %p550 = pneg %p150
      $region50: #{gate_net_forward.1} parent=47 // pred_check_branch
        %552 = sbr.rel (%p550) target = $region52
      $region51: #{gate_net_forward.1} parent=47 // pred_region
        %s553 = smul.u32 16, %s17
        %p554 = scmp.lt.s32.totalorder %s553, 127
        %s555 = scalar_select %p554, %s553, 127
        %s556 = smul.addr %s555, 4
        %s557 = scalar_lea.vmem %s5, %s556
      $region52: #{gate_net_forward.1} parent=47 // pred_fallthru
        _
    $region48: #{gate_net_forward.1} parent=5 // pred_fallthru
      _
  $region6: #{gate_net_forward.1} parent=0 // loop_footer
    %s15 = sadd.s32 1, %s11
  $region7: #{gate_net_forward.1} parent=0 // loop_footer_branch
    %10 = sbr.rel target = $region3
  $region8: #{gate_net_forward.1} parent=0 // loop_exit
    _

</llo_original>
